<compile_context>
chip_gen: v7x
topology: tpu7x:2x2x1
jax: 0.10.0
libtpu: 0.0.40
codegen_flags: <defaults>
</compile_context>

<pallas_src>
import jax
import jax.numpy as jnp
from jax.experimental import pallas as pl
from jax.experimental.pallas import tpu as pltpu


# ----------------------------------------------------------------------------
# 1) Zero-copy identity: alias input -> output, no DMA, no compute.
# ----------------------------------------------------------------------------
def _identity_alias_kernel(x_hbm_ref, o_hbm_ref):
    # The output HBM buffer *is* the input buffer (input_output_aliases={0:0}),
    # so it already holds x. Nothing to read, compute, or write.
    del x_hbm_ref, o_hbm_ref


def identity(x: jax.Array) -> jax.Array:
    """Identity.forward as a Pallas call with zero kernel-side HBM traffic.

    Requires the input buffer to be donatable for true zero-copy; if x is
    still live in the caller, XLA inserts a copy before honoring the alias.
    """
    return pl.pallas_call(
        _identity_alias_kernel,
        out_shape=jax.ShapeDtypeStruct(x.shape, x.dtype),
        in_specs=[pl.BlockSpec(memory_space=pl.ANY)],   # raw HBM ref, no auto-DMA
        out_specs=pl.BlockSpec(memory_space=pl.ANY),
        input_output_aliases={0: 0},                    # output buffer == input buffer
    )(x)


# ----------------------------------------------------------------------------
# 2) Materialized copy: single direct HBM -> HBM DMA (no VMEM round trip).
# ----------------------------------------------------------------------------
def _identity_dma_kernel(x_hbm_ref, o_hbm_ref, sem):
    cp = pltpu.make_async_copy(x_hbm_ref, o_hbm_ref, sem)
    cp.start()
    cp.wait()


def identity_copy(x: jax.Array) -> jax.Array:
    """Identity.forward that returns a fresh buffer via one HBM→HBM DMA.

    Pure HBM-bandwidth work: no grid, no VMEM staging, so it is immune to the
    v7x 64 MiB / v5e 16 MiB-default scoped-VMEM limits and works for any
    shape/dtype (no divisibility-by-128 requirement).
    """
    return pl.pallas_call(
        _identity_dma_kernel,
        out_shape=jax.ShapeDtypeStruct(x.shape, x.dtype),
        in_specs=[pl.BlockSpec(memory_space=pl.ANY)],   # raw HBM ref
        out_specs=pl.BlockSpec(memory_space=pl.ANY),    # raw HBM ref
        scratch_shapes=[pltpu.SemaphoreType.DMA],
    )(x)


if __name__ == "__main__":
    key = jax.random.PRNGKey(0)
    x = jax.random.normal(key, (2, 4, 16, 16), dtype=jnp.float32)  # NCHW

    y = identity(x)        # zero-copy aliased path (primary)
    y2 = identity_copy(x)  # materialized-copy path (single HBM->HBM DMA)
    jax.block_until_ready((y, y2))

    assert y.shape == x.shape and y.dtype == x.dtype
    assert y2.shape == x.shape and y2.dtype == x.dtype
    assert bool(jnp.all(y == x))
    assert bool(jnp.all(y2 == x))
    print("KERNEL_OK")
</pallas_src>

<mosaic_0001>
module attributes {stable_mosaic.version = 11 : i64} {
  func.func @_identity_alias_kernel(%arg0: memref<2x4x16x16xf32, #tpu.memory_space<any>>, %arg1: memref<2x4x16x16xf32, #tpu.memory_space<any>>) attributes {dimension_semantics = [], scalar_prefetch = 0 : i64, scratch_operands = 0 : i64, tpu.core_type = #tpu.core_type<tc>} {
    return
  }
}

</mosaic_0001>

<llo_original>
// kernel: tpu_custom_call.1
$region0: #{tpu_custom_call.1}
  #allocation0 [shape = 'u32[]', space=smem, size = 0x4, offset = 0x4, fixed_abs, tag = 'smem constant byte address 0x4 - core index']
  #allocation1 [shape = 'u32[144,128]{1,0:T(1,128)}', space=vmem, size = 0x12000, scoped, tag = 'internal scratch']
  %s0 = inlined_call_operand.hbm [shape: f32[2,4,16,16], index: 0, kind: input, shape index: {}, may-alias: {0,1}]
  %s1 = inlined_call_operand.hbm [shape: f32[2,4,16,16], index: 1, kind: output, shape index: {}, may-alias: {0,1}]
  %s2 = sld [smem:[#allocation0]]
  $region2: #{tpu_custom_call.1} parent=0
    _
  %s4 = ssub.s32 1, %s2
  %s5 = scalar_select 0, %s4, %s2

</llo_original>
